<compile_context>
chip_gen: v5e
topology: v5e:2x2
jax: 0.10.0
libtpu: 0.0.40
codegen_flags: <defaults>
</compile_context>

<pallas_src>
import functools

import jax
import jax.numpy as jnp
from jax.experimental import pallas as pl
from jax.experimental.pallas import tpu as pltpu


def _dma_clone_kernel(n_tables, *refs):
    """Issue one HBM->HBM DMA per table; start all (overlapped), then wait."""
    in_refs = refs[:n_tables]
    out_refs = refs[n_tables:2 * n_tables]
    sem = refs[2 * n_tables]
    copies = [
        pltpu.make_async_copy(in_refs[i], out_refs[i], sem.at[i])
        for i in range(n_tables)
    ]
    for c in copies:
        c.start()
    for c in copies:
        c.wait()


def _materialize_tables(tables):
    """Single pallas_call that clones every weight table HBM->HBM.

    Inputs and outputs stay resident in HBM (memory_space=pl.ANY); the kernel
    body only enqueues DMAs, so there is no VMEM staging, no grid, no
    per-step overhead and no padding traffic.  Each per-ntype output buffer is
    written directly by its own DMA (no post-kernel slicing pass).
    """
    n = len(tables)
    total_bytes = sum(int(t.size) * t.dtype.itemsize for t in tables)
    kernel = functools.partial(_dma_clone_kernel, n)
    return pl.pallas_call(
        kernel,
        out_shape=tuple(jax.ShapeDtypeStruct(t.shape, t.dtype) for t in tables),
        in_specs=[pl.BlockSpec(memory_space=pl.ANY) for _ in range(n)],
        out_specs=tuple(pl.BlockSpec(memory_space=pl.ANY) for _ in range(n)),
        scratch_shapes=[pltpu.SemaphoreType.DMA((n,))],
        cost_estimate=pl.CostEstimate(
            flops=0, transcendentals=0, bytes_accessed=2 * total_bytes),
    )(*tables)


class DGLREmbeddingPallas:
    """JAX/Pallas port of DGLREmbedding.

    One embedding table per node type (nn.Embedding(num_nodes, dim), N(0,1)
    init).  forward() returns a clone of each live table for the node types of
    the incoming block, sorted by type name — produced by one pallas_call that
    writes each per-ntype output buffer directly via HBM->HBM DMA.
    """

    def __init__(self, num_nodes_per_ntype: dict, embedding_dim: int, key):
        self.embedding_dim = embedding_dim
        self.weights = {}
        for nty in sorted(num_nodes_per_ntype):
            key, sub = jax.random.split(key)
            n = num_nodes_per_ntype[nty]
            self.weights[nty] = jax.random.normal(
                sub, (n, embedding_dim), dtype=jnp.float32)

    def forward(self, block_ntypes):
        ntypes = sorted(list(block_ntypes))
        # Live parameters at call time (never a stale snapshot).
        tables = [self.weights[nty] for nty in ntypes]
        outs = _materialize_tables(tables)
        return {nty: out for nty, out in zip(ntypes, outs)}


if __name__ == "__main__":
    key = jax.random.PRNGKey(0)

    # Small synthetic heterograph metadata: two node types.
    num_nodes_per_ntype = {"author": 24, "paper": 16}
    embedding_dim = 32

    model = DGLREmbeddingPallas(num_nodes_per_ntype, embedding_dim, key)

    # The "block" seen in forward exposes the same node types (unsorted).
    block_ntypes = ["paper", "author"]

    out = model.forward(block_ntypes)
    out = jax.block_until_ready(out)

    # Sanity checks: keys sorted, shapes match, values equal the parameters.
    assert list(out.keys()) == sorted(block_ntypes)
    for nty in out:
        assert out[nty].shape == (num_nodes_per_ntype[nty], embedding_dim)
        assert jnp.allclose(out[nty], model.weights[nty])

    print("KERNEL_OK")
</pallas_src>

<mosaic_0001>
module attributes {stable_mosaic.version = 11 : i64} {
  func.func @_dma_clone_kernel(%arg0: memref<24x32xf32, #tpu.memory_space<any>>, %arg1: memref<16x32xf32, #tpu.memory_space<any>>, %arg2: memref<24x32xf32, #tpu.memory_space<any>>, %arg3: memref<16x32xf32, #tpu.memory_space<any>>, %arg4: memref<2x!tpu.dma_semaphore, #tpu.memory_space<semaphore_mem>>) attributes {dimension_semantics = [], scalar_prefetch = 0 : i64, scratch_operands = 1 : i64, tpu.core_type = #tpu.core_type<tc>} {
    %c0_i32 = arith.constant 0 : i32
    %0 = tpu.memref_slice %arg4[%c0_i32] : memref<2x!tpu.dma_semaphore, #tpu.memory_space<semaphore_mem>> -> memref<1x!tpu.dma_semaphore, #tpu.memory_space<semaphore_mem>>
    %1 = tpu.memref_squeeze %0 : memref<1x!tpu.dma_semaphore, #tpu.memory_space<semaphore_mem>> -> memref<!tpu.dma_semaphore, #tpu.memory_space<semaphore_mem>>
    tpu.enqueue_dma source(%arg0 : memref<24x32xf32, #tpu.memory_space<any>>) target(%arg2 : memref<24x32xf32, #tpu.memory_space<any>>) target_semaphore(%1 : memref<!tpu.dma_semaphore, #tpu.memory_space<semaphore_mem>>)
    %c1_i32 = arith.constant 1 : i32
    %2 = tpu.memref_slice %arg4[%c1_i32] : memref<2x!tpu.dma_semaphore, #tpu.memory_space<semaphore_mem>> -> memref<1x!tpu.dma_semaphore, #tpu.memory_space<semaphore_mem>>
    %3 = tpu.memref_squeeze %2 : memref<1x!tpu.dma_semaphore, #tpu.memory_space<semaphore_mem>> -> memref<!tpu.dma_semaphore, #tpu.memory_space<semaphore_mem>>
    tpu.enqueue_dma source(%arg1 : memref<16x32xf32, #tpu.memory_space<any>>) target(%arg3 : memref<16x32xf32, #tpu.memory_space<any>>) target_semaphore(%3 : memref<!tpu.dma_semaphore, #tpu.memory_space<semaphore_mem>>)
    %c0_i32_0 = arith.constant 0 : i32
    %4 = tpu.memref_slice %arg4[%c0_i32_0] : memref<2x!tpu.dma_semaphore, #tpu.memory_space<semaphore_mem>> -> memref<1x!tpu.dma_semaphore, #tpu.memory_space<semaphore_mem>>
    %5 = tpu.memref_squeeze %4 : memref<1x!tpu.dma_semaphore, #tpu.memory_space<semaphore_mem>> -> memref<!tpu.dma_semaphore, #tpu.memory_space<semaphore_mem>>
    tpu.wait_dma2 semaphore(%5 : memref<!tpu.dma_semaphore, #tpu.memory_space<semaphore_mem>>) src(%arg0 : memref<24x32xf32, #tpu.memory_space<any>>) dst(%arg2 : memref<24x32xf32, #tpu.memory_space<any>>)
    %c1_i32_1 = arith.constant 1 : i32
    %6 = tpu.memref_slice %arg4[%c1_i32_1] : memref<2x!tpu.dma_semaphore, #tpu.memory_space<semaphore_mem>> -> memref<1x!tpu.dma_semaphore, #tpu.memory_space<semaphore_mem>>
    %7 = tpu.memref_squeeze %6 : memref<1x!tpu.dma_semaphore, #tpu.memory_space<semaphore_mem>> -> memref<!tpu.dma_semaphore, #tpu.memory_space<semaphore_mem>>
    tpu.wait_dma2 semaphore(%7 : memref<!tpu.dma_semaphore, #tpu.memory_space<semaphore_mem>>) src(%arg1 : memref<16x32xf32, #tpu.memory_space<any>>) dst(%arg3 : memref<16x32xf32, #tpu.memory_space<any>>)
    return
  }
}

</mosaic_0001>

<llo_original>
// kernel: tpu_custom_call.1
$region0: #{tpu_custom_call.1}
  #allocation0 [shape = 'u32[]', space=smem, size = 0x4, offset = 0x4, fixed_abs, tag = 'smem constant byte address 0x4 - core index']
  #allocation1 [shape = 'u32[72,128]{1,0:T(1,128)}', space=vmem, size = 0x9000, scoped, tag = 'internal scratch']
  #allocation2 [shape = 's32[2]{0}', space=sflag, size = 0x8, scoped, tag = 'scratch operand']
  #allocation3 [shape = 's32[]', space=sflag, size = 0x4, offset = 0, fixed_abs, tag = 'sflag constant byte address 0x0 - dummy sync flag']
  #allocation4 [shape = 'u32[0]{0}', space=smem, size = 0, offset = 0, fixed_abs, tag = 'smem constant byte address 0x0 - null']
  #allocation5 [shape = 's32[]', space=sflag, size = 0x4, offset = 0, fixed_abs, tag = 'sflag constant byte address 0x0 - dummy sync flag']
  #allocation6 [shape = 'u32[0]{0}', space=smem, size = 0, offset = 0, fixed_abs, tag = 'smem constant byte address 0x0 - null']
  %s0 = inlined_call_operand.hbm [shape: f32[24,32], index: 0, kind: input, shape index: {}]
  %s1 = inlined_call_operand.hbm [shape: f32[16,32], index: 1, kind: input, shape index: {}]
  %s2 = inlined_call_operand.hbm [shape: f32[24,32], index: 2, kind: output, shape index: {0}]
  %s3 = inlined_call_operand.hbm [shape: f32[16,32], index: 3, kind: output, shape index: {1}]
  %4 = xla_tuple %s2, %s3
  %s5 = sld [smem:[#allocation0]]
  $region2: #{tpu_custom_call.1} parent=0
    _
  %s7 = ssub.s32 1, %s5
  %s8 = scalar_select 0, %s7, %s5
  %s10 = sshll.u32 1, 14
  %s11 = sxor.u32 4294967295, %s10
  %s13 = sshll.u32 %s0, 4
  %s14 = int_to_ptr.hbm [resolvable:$true] %s13
  %s15 = sshll.u32 %s2, 4
  %s16 = int_to_ptr.hbm [resolvable:$true] %s15
  %19 = dma.general %s14, 384, %s16, [#allocation2], [#allocation3], [#allocation4], 0, 0
  %s20 = scalar_lea.sflag [#allocation2], 1
  %s22 = sshll.u32 1, 14
  %s23 = sxor.u32 4294967295, %s22
  %s25 = sshll.u32 %s1, 4
  %s26 = int_to_ptr.hbm [resolvable:$true] %s25
  %s27 = sshll.u32 %s3, 4
  %s28 = int_to_ptr.hbm [resolvable:$true] %s27
  %31 = dma.general %s26, 256, %s28, %s20, [#allocation5], [#allocation6], 0, 0
  %s32 = smul.u32 24, 1
  %s33 = sshll.u32 %s32, 4
  %34 = dma.done [#allocation2], %s33
  %s35 = smul.u32 16, 1
  %s36 = sshll.u32 %s35, 4
  %37 = dma.done %s20, %s36
  %38 = vsyncmov [#allocation2]
  %s39 = vpop.sfrf %38
  %p40 = scmp.eq.s32.totalorder %s39, 0
  %p41 = pneg %p40
  %43 = shalt.err (%p41)
  %s44 = scalar_lea.sflag [#allocation2], 1
  %45 = vsyncmov %s44
  %s46 = vpop.sfrf %45
  %p47 = scmp.eq.s32.totalorder %s46, 0
  %p48 = pneg %p47
  %50 = shalt.err (%p48)

</llo_original>
